<compile_context>
chip_gen: v6e
topology: v6e:2x2x1
jax: 0.10.0
libtpu: 0.0.40
codegen_flags: <defaults>
</compile_context>

<pallas_src>
import math
import functools

import jax
import jax.numpy as jnp
from jax.experimental import pallas as pl
from jax.experimental.pallas import tpu as pltpu


_MiB = 1024 * 1024


# ----------------------------------------------------------------------------
# Tiling helpers
# ----------------------------------------------------------------------------
def _pick_channel_tile(seq_len, d_model, itemsize, budget_bytes=4 * _MiB):
    """Largest D-tile that is a multiple of 128, divides d_model, and keeps one
    (T, Dt) block under the byte budget.  Falls back to full D (legal as the
    full-extent exception) when d_model is not a multiple of 128."""
    if d_model % 128 != 0:
        return d_model
    best = 128
    for cand in range(128, min(d_model, 1024) + 1, 128):
        if d_model % cand == 0 and seq_len * cand * itemsize <= budget_bytes:
            best = cand
    return best


def _pick_time_tile(seq_len, d_model, itemsize, budget_bytes=2 * _MiB):
    """Largest T-tile that is a multiple of 8, divides seq_len, and keeps one
    (Tt, D) block under the byte budget.  Returns None if seq_len % 8 != 0
    (caller then uses a full-T block)."""
    if seq_len % 8 != 0:
        return None
    best = 8
    for cand in range(8, min(seq_len, 1024) + 1, 8):
        if seq_len % cand == 0 and cand * d_model * itemsize <= budget_bytes:
            best = cand
    return best


# ----------------------------------------------------------------------------
# Pallas kernels
# ----------------------------------------------------------------------------
def _groupconv_kernel(x_ref, w_ref, b_ref, o_ref, *, seq_len, ksize, pad_left):
    """Depthwise ('groups=d_model') 1D conv positional embedding + residual add.

    x_ref : (T, Dt)  input tile (batch dim squeezed out by the BlockSpec)
    w_ref : (K, Dt)  depthwise conv weights (tap k, channel d)
    b_ref : (1, Dt)  conv bias
    o_ref : (T, Dt)  output = x + conv(x)   ('same' padding handled in-register)
    """
    x = x_ref[...]                              # single VMEM load of the tile
    xf = x.astype(jnp.float32)
    w = w_ref[...].astype(jnp.float32)          # hoisted weight load
    b = b_ref[...].astype(jnp.float32)          # (1, Dt)
    t_idx = jax.lax.broadcasted_iota(jnp.int32, xf.shape, 0)   # (T, Dt) time index

    # out[t, d] = x[t, d] + bias[d] + sum_k w[k, d] * x[t + k - pad_left, d] (OOB -> 0)
    acc = xf + b                                # residual + bias folded into the init
    for k in range(ksize):                      # K small & static -> unrolled
        shift = k - pad_left
        if shift == 0:
            tap = xf
        else:
            # circular sublane rotation on the XLU, then mask the wrapped rows
            rolled = pltpu.roll(xf, shift=(-shift) % seq_len, axis=0)
            valid = (t_idx + shift >= 0) & (t_idx + shift < seq_len)
            tap = jnp.where(valid, rolled, 0.0)
        acc = acc + w[k:k + 1, :] * tap         # (1, Dt) broadcast over T

    o_ref[...] = acc.astype(o_ref.dtype)


def _add_pe_kernel(x_ref, pe_ref, o_ref):
    """Sinusoidal positional encoding add: out = x + pe (tile-wise)."""
    o_ref[...] = (x_ref[...] + pe_ref[...]).astype(o_ref.dtype)


# ----------------------------------------------------------------------------
# Wrappers
# ----------------------------------------------------------------------------
def grouped_convolution(x, weight, bias):
    """x: (B, T, D); weight: (D, 1, K) (torch Conv1d layout); bias: (D,)."""
    B, T, D = x.shape
    K = weight.shape[-1]
    pad_left = (K - 1) // 2                      # PyTorch padding='same', stride=1

    w_kd = jnp.transpose(weight[:, 0, :], (1, 0)).astype(jnp.float32)   # (K, D)
    b_1d = bias.reshape(1, D).astype(jnp.float32)                       # (1, D)

    itemsize = x.dtype.itemsize
    Dt = _pick_channel_tile(T, D, itemsize)
    # Batch innermost: weight/bias block indices are constant across it -> DMA skipped.
    grid = (D // Dt, B)

    block_bytes = 2 * T * Dt * itemsize + K * Dt * 4 + Dt * 4           # in + out + params
    vmem_bytes = int(min(max(3 * block_bytes, 4 * _MiB), 32 * _MiB))

    kernel = functools.partial(_groupconv_kernel, seq_len=T, ksize=K, pad_left=pad_left)
    return pl.pallas_call(
        kernel,
        out_shape=jax.ShapeDtypeStruct((B, T, D), x.dtype),
        grid_spec=pltpu.PrefetchScalarGridSpec(
            num_scalar_prefetch=0,
            grid=grid,
            in_specs=[
                pl.BlockSpec((None, T, Dt), lambda d, b: (b, 0, d)),  # x (batch squeezed)
                pl.BlockSpec((K, Dt), lambda d, b: (0, d)),           # weights (reused over b)
                pl.BlockSpec((1, Dt), lambda d, b: (0, d)),           # bias (reused over b)
            ],
            out_specs=pl.BlockSpec((None, T, Dt), lambda d, b: (b, 0, d)),
        ),
        compiler_params=pltpu.CompilerParams(
            dimension_semantics=("parallel", "parallel"),
            vmem_limit_bytes=vmem_bytes,
        ),
    )(x, w_kd, b_1d)


def make_sinusoidal_pe(d_model, max_len=5000, dtype=jnp.float32):
    """Exactly mirrors SinusoidalPositionalEncoding buffer construction."""
    assert d_model % 2 == 0, "sinusoidal PE requires even d_model (matches torch behavior)"
    positions = jnp.arange(0, max_len, dtype=jnp.float32)[:, None]       # (L, 1)
    i_vals = jnp.arange(0, d_model // 2, dtype=jnp.float32)              # (D/2,)
    freqs = 10000.0 ** (-2.0 * i_vals / d_model)                         # (D/2,)
    pe_sin = jnp.sin(positions * freqs)                                  # (L, D/2)
    pe_cos = jnp.cos(positions * freqs)                                  # (L, D/2)
    pe = jnp.zeros((max_len, d_model), dtype=jnp.float32)
    pe = pe.at[:, 0::2].set(pe_sin)
    pe = pe.at[:, 1::2].set(pe_cos)
    return pe.astype(dtype)                                              # (L, D)


def sinusoidal_positional_encoding(x, pe):
    """x: (B, T, D); pe: (max_len, D)."""
    B, T, D = x.shape
    if pe.dtype != x.dtype:
        pe = pe.astype(x.dtype)                 # safety net; callers should pre-cast & cache

    itemsize = x.dtype.itemsize
    Tt = _pick_time_tile(T, D, itemsize)
    if Tt is None:
        # T not a multiple of 8: fall back to a full-T block on a sliced PE buffer
        pe_in, Tt = pe[:T], T
    else:
        # read needed rows straight out of the full PE buffer via the index_map
        pe_in = pe

    # Batch innermost: the PE block index does not depend on b, so Pallas skips the
    # re-DMA across the batch -> PE is read once per T-tile instead of once per (b, t).
    grid = (T // Tt, B)
    block_bytes = 3 * Tt * D * itemsize
    vmem_bytes = int(min(max(3 * block_bytes, 4 * _MiB), 32 * _MiB))

    return pl.pallas_call(
        _add_pe_kernel,
        out_shape=jax.ShapeDtypeStruct((B, T, D), x.dtype),
        grid_spec=pltpu.PrefetchScalarGridSpec(
            num_scalar_prefetch=0,
            grid=grid,
            in_specs=[
                pl.BlockSpec((None, Tt, D), lambda t, b: (b, t, 0)),   # x (batch squeezed)
                pl.BlockSpec((Tt, D), lambda t, b: (t, 0)),            # pe (reused over b)
            ],
            out_specs=pl.BlockSpec((None, Tt, D), lambda t, b: (b, t, 0)),
        ),
        compiler_params=pltpu.CompilerParams(
            dimension_semantics=("parallel", "parallel"),
            vmem_limit_bytes=vmem_bytes,
        ),
    )(x, pe_in)


class TransformerEmbedding:
    """JAX/Pallas port of the PyTorch TransformerEmbedding module (eval mode)."""

    supported_embeddings = ["sinusoidal", "groupconv"]

    def __init__(self, embedding=None, d_model=256, dropout=0.1, max_len=5000,
                 kernel_size=4, key=None):
        assert embedding in self.supported_embeddings or embedding is None
        self.embedding_type = embedding
        self.d_model = d_model
        self.dropout_p = dropout  # eval-mode: identity

        if embedding == "sinusoidal":
            self.pe = make_sinusoidal_pe(d_model, max_len=max_len)
            self._pe_cache = {jnp.dtype(self.pe.dtype): self.pe}   # dtype -> cast buffer
        elif embedding == "groupconv":
            key = jax.random.PRNGKey(0) if key is None else key
            kw, kb = jax.random.split(key)
            # Conv1d(d_model, d_model, kernel_size, groups=d_model): weight (D, 1, K)
            # kaiming_normal_(a=0), fan_in = 1 * K  -> std = sqrt(2 / K)
            std = math.sqrt(2.0 / kernel_size)
            self.conv_weight = std * jax.random.normal(kw, (d_model, 1, kernel_size),
                                                       dtype=jnp.float32)
            # torch default bias init: U(-1/sqrt(fan_in), 1/sqrt(fan_in))
            bound = 1.0 / math.sqrt(kernel_size)
            self.conv_bias = jax.random.uniform(kb, (d_model,), dtype=jnp.float32,
                                                minval=-bound, maxval=bound)

    def _pe_for_dtype(self, dtype):
        dtype = jnp.dtype(dtype)
        pe = self._pe_cache.get(dtype)
        if pe is None:
            pe = self.pe.astype(dtype)          # cast the full buffer once, then reuse
            self._pe_cache[dtype] = pe
        return pe

    def __call__(self, x):
        if self.embedding_type == "sinusoidal":
            x = sinusoidal_positional_encoding(x, self._pe_for_dtype(x.dtype))
        elif self.embedding_type == "groupconv":
            x = grouped_convolution(x, self.conv_weight, self.conv_bias)
        # dropout: eval mode -> identity
        return x


# ----------------------------------------------------------------------------
# Demo / smoke test
# ----------------------------------------------------------------------------
if __name__ == "__main__":
    def conv_ref(x, weight, bias):
        """Pure-JAX depthwise conv ('same' pad) + residual, for checking."""
        Bn, Tn, Dn = x.shape
        Kn = weight.shape[-1]
        p_l, p_r = (Kn - 1) // 2, (Kn - 1) - (Kn - 1) // 2
        xp = jnp.pad(x, ((0, 0), (p_l, p_r), (0, 0)))
        w_kd = jnp.transpose(weight[:, 0, :], (1, 0))
        out = x + bias[None, None, :]
        for k in range(Kn):
            out = out + w_kd[k][None, None, :] * xp[:, k:k + Tn, :]
        return out

    key = jax.random.PRNGKey(0)
    kx, kx2 = jax.random.split(key)

    # --- small shapes (module defaults scaled down) -------------------------
    B, T, D, K = 2, 8, 32, 4
    x = jax.random.normal(kx, (B, T, D), dtype=jnp.float32)

    emb_gc = TransformerEmbedding(embedding="groupconv", d_model=D, kernel_size=K,
                                  key=jax.random.PRNGKey(1))
    y_gc = emb_gc(x)
    jax.block_until_ready(y_gc)
    assert y_gc.shape == (B, T, D)
    assert jnp.allclose(y_gc, conv_ref(x, emb_gc.conv_weight, emb_gc.conv_bias),
                        atol=1e-5, rtol=1e-5)

    emb_sin = TransformerEmbedding(embedding="sinusoidal", d_model=D, max_len=64)
    y_sin = emb_sin(x)
    jax.block_until_ready(y_sin)
    assert y_sin.shape == (B, T, D)
    assert jnp.allclose(y_sin, x + emb_sin.pe[:T][None], atol=1e-6, rtol=1e-6)

    # --- medium shapes: exercise multi-block D / T tiling -------------------
    B2, T2, D2 = 2, 2048, 1024
    x2 = jax.random.normal(kx2, (B2, T2, D2), dtype=jnp.float32)

    emb_gc2 = TransformerEmbedding(embedding="groupconv", d_model=D2, kernel_size=K,
                                   key=jax.random.PRNGKey(2))
    y_gc2 = emb_gc2(x2)
    jax.block_until_ready(y_gc2)
    assert jnp.allclose(y_gc2, conv_ref(x2, emb_gc2.conv_weight, emb_gc2.conv_bias),
                        atol=1e-4, rtol=1e-4)

    emb_sin2 = TransformerEmbedding(embedding="sinusoidal", d_model=D2, max_len=T2)
    y_sin2 = emb_sin2(x2)
    jax.block_until_ready(y_sin2)
    assert jnp.allclose(y_sin2, x2 + emb_sin2.pe[:T2][None], atol=1e-6, rtol=1e-6)

    print("KERNEL_OK")
</pallas_src>

<mosaic_0001>
module attributes {stable_mosaic.version = 11 : i64} {
  func.func @_groupconv_kernel(%arg0: i32, %arg1: i32, %arg2: memref<1x8x32xf32, #tpu.memory_space<vmem>>, %arg3: memref<4x32xf32, #tpu.memory_space<vmem>>, %arg4: memref<1x32xf32, #tpu.memory_space<vmem>>, %arg5: memref<1x8x32xf32, #tpu.memory_space<vmem>>) attributes {dimension_semantics = [#tpu.dimension_semantics<parallel>, #tpu.dimension_semantics<parallel>], iteration_bounds = array<i64: 1, 2>, scalar_prefetch = 0 : i64, scratch_operands = 0 : i64, tpu.core_type = #tpu.core_type<tc>, window_params = [{transform_indices = @transform_0, window_bounds = array<i64: 1, 8, 32>}, {transform_indices = @transform_1, window_bounds = array<i64: 4, 32>}, {transform_indices = @transform_2, window_bounds = array<i64: 1, 32>}, {transform_indices = @transform_3, window_bounds = array<i64: 1, 8, 32>}]} {
    %c0 = arith.constant 0 : index
    %c0_0 = arith.constant 0 : index
    %c0_1 = arith.constant 0 : index
    %0 = vector.load %arg2[%c0, %c0_0, %c0_1] : memref<1x8x32xf32, #tpu.memory_space<vmem>>, vector<1x8x32xf32>
    %1 = vector.shape_cast %0 : vector<1x8x32xf32> to vector<8x32xf32>
    %c0_2 = arith.constant 0 : index
    %c0_3 = arith.constant 0 : index
    %2 = vector.load %arg3[%c0_2, %c0_3] : memref<4x32xf32, #tpu.memory_space<vmem>>, vector<4x32xf32>
    %c0_4 = arith.constant 0 : index
    %c0_5 = arith.constant 0 : index
    %3 = vector.load %arg4[%c0_4, %c0_5] : memref<1x32xf32, #tpu.memory_space<vmem>>, vector<1x32xf32>
    %4 = tpu.iota {dimensions = array<i32: 0>} : vector<8x32xi32>
    %5 = vector.broadcast %3 : vector<1x32xf32> to vector<8x32xf32>
    %6 = arith.addf %1, %5 : vector<8x32xf32>
    %c1_i32 = arith.constant 1 : i32
    %7 = tpu.dynamic_rotate %1 by %c1_i32 dim 0 : vector<8x32xf32>, i32 -> vector<8x32xf32>
    %c-1_i32 = arith.constant -1 : i32
    %8 = vector.broadcast %c-1_i32 : i32 to vector<8x32xi32>
    %9 = arith.addi %4, %8 : vector<8x32xi32>
    %c0_i32 = arith.constant 0 : i32
    %10 = vector.broadcast %c0_i32 : i32 to vector<8x32xi32>
    %11 = arith.cmpi sge, %9, %10 : vector<8x32xi32>
    %c-1_i32_6 = arith.constant -1 : i32
    %12 = vector.broadcast %c-1_i32_6 : i32 to vector<8x32xi32>
    %13 = arith.addi %4, %12 : vector<8x32xi32>
    %c8_i32 = arith.constant 8 : i32
    %14 = vector.broadcast %c8_i32 : i32 to vector<8x32xi32>
    %15 = arith.cmpi slt, %13, %14 : vector<8x32xi32>
    %16 = arith.andi %11, %15 : vector<8x32xi1>
    %cst = arith.constant 0.000000e+00 : f32
    %17 = vector.broadcast %cst : f32 to vector<8x32xf32>
    %18 = arith.select %16, %7, %17 : vector<8x32xi1>, vector<8x32xf32>
    %19 = vector.extract_strided_slice %2 {offsets = [0, 0], sizes = [1, 32], strides = [1, 1]} : vector<4x32xf32> to vector<1x32xf32>
    %20 = vector.broadcast %19 : vector<1x32xf32> to vector<8x32xf32>
    %21 = arith.mulf %20, %18 : vector<8x32xf32>
    %22 = arith.addf %6, %21 : vector<8x32xf32>
    %23 = vector.extract_strided_slice %2 {offsets = [1, 0], sizes = [1, 32], strides = [1, 1]} : vector<4x32xf32> to vector<1x32xf32>
    %24 = vector.broadcast %23 : vector<1x32xf32> to vector<8x32xf32>
    %25 = arith.mulf %24, %1 : vector<8x32xf32>
    %26 = arith.addf %22, %25 : vector<8x32xf32>
    %c7_i32 = arith.constant 7 : i32
    %27 = tpu.dynamic_rotate %1 by %c7_i32 dim 0 : vector<8x32xf32>, i32 -> vector<8x32xf32>
    %c1_i32_7 = arith.constant 1 : i32
    %28 = vector.broadcast %c1_i32_7 : i32 to vector<8x32xi32>
    %29 = arith.addi %4, %28 : vector<8x32xi32>
    %c0_i32_8 = arith.constant 0 : i32
    %30 = vector.broadcast %c0_i32_8 : i32 to vector<8x32xi32>
    %31 = arith.cmpi sge, %29, %30 : vector<8x32xi32>
    %c1_i32_9 = arith.constant 1 : i32
    %32 = vector.broadcast %c1_i32_9 : i32 to vector<8x32xi32>
    %33 = arith.addi %4, %32 : vector<8x32xi32>
    %c8_i32_10 = arith.constant 8 : i32
    %34 = vector.broadcast %c8_i32_10 : i32 to vector<8x32xi32>
    %35 = arith.cmpi slt, %33, %34 : vector<8x32xi32>
    %36 = arith.andi %31, %35 : vector<8x32xi1>
    %cst_11 = arith.constant 0.000000e+00 : f32
    %37 = vector.broadcast %cst_11 : f32 to vector<8x32xf32>
    %38 = arith.select %36, %27, %37 : vector<8x32xi1>, vector<8x32xf32>
    %39 = vector.extract_strided_slice %2 {offsets = [2, 0], sizes = [1, 32], strides = [1, 1]} : vector<4x32xf32> to vector<1x32xf32>
    %40 = vector.broadcast %39 : vector<1x32xf32> to vector<8x32xf32>
    %41 = arith.mulf %40, %38 : vector<8x32xf32>
    %42 = arith.addf %26, %41 : vector<8x32xf32>
    %c6_i32 = arith.constant 6 : i32
    %43 = tpu.dynamic_rotate %1 by %c6_i32 dim 0 : vector<8x32xf32>, i32 -> vector<8x32xf32>
    %c2_i32 = arith.constant 2 : i32
    %44 = vector.broadcast %c2_i32 : i32 to vector<8x32xi32>
    %45 = arith.addi %4, %44 : vector<8x32xi32>
    %c0_i32_12 = arith.constant 0 : i32
    %46 = vector.broadcast %c0_i32_12 : i32 to vector<8x32xi32>
    %47 = arith.cmpi sge, %45, %46 : vector<8x32xi32>
    %c2_i32_13 = arith.constant 2 : i32
    %48 = vector.broadcast %c2_i32_13 : i32 to vector<8x32xi32>
    %49 = arith.addi %4, %48 : vector<8x32xi32>
    %c8_i32_14 = arith.constant 8 : i32
    %50 = vector.broadcast %c8_i32_14 : i32 to vector<8x32xi32>
    %51 = arith.cmpi slt, %49, %50 : vector<8x32xi32>
    %52 = arith.andi %47, %51 : vector<8x32xi1>
    %cst_15 = arith.constant 0.000000e+00 : f32
    %53 = vector.broadcast %cst_15 : f32 to vector<8x32xf32>
    %54 = arith.select %52, %43, %53 : vector<8x32xi1>, vector<8x32xf32>
    %55 = vector.extract_strided_slice %2 {offsets = [3, 0], sizes = [1, 32], strides = [1, 1]} : vector<4x32xf32> to vector<1x32xf32>
    %56 = vector.broadcast %55 : vector<1x32xf32> to vector<8x32xf32>
    %57 = arith.mulf %56, %54 : vector<8x32xf32>
    %58 = arith.addf %42, %57 : vector<8x32xf32>
    %c0_16 = arith.constant 0 : index
    %c0_17 = arith.constant 0 : index
    %c0_18 = arith.constant 0 : index
    %59 = vector.load %arg5[%c0_16, %c0_17, %c0_18] : memref<1x8x32xf32, #tpu.memory_space<vmem>>, vector<1x8x32xf32>
    %60 = vector.shape_cast %59 : vector<1x8x32xf32> to vector<8x32xf32>
    %61 = vector.shape_cast %58 : vector<8x32xf32> to vector<1x8x32xf32>
    tpu.vector_store %arg5[%c0_16, %c0_17, %c0_18], %61 {strides = array<i32>} : memref<1x8x32xf32, #tpu.memory_space<vmem>>, vector<1x8x32xf32>,
    return
  }
  func.func @transform_0(%arg0: i32, %arg1: i32) -> (i32, i32, i32) {
    %c0_i32 = arith.constant 0 : i32
    %c0_i32_0 = arith.constant 0 : i32
    return %arg1, %c0_i32, %arg0 : i32, i32, i32
  }
  func.func @transform_1(%arg0: i32, %arg1: i32) -> (i32, i32) {
    %c0_i32 = arith.constant 0 : i32
    %c0_i32_0 = arith.constant 0 : i32
    return %c0_i32, %arg0 : i32, i32
  }
  func.func @transform_2(%arg0: i32, %arg1: i32) -> (i32, i32) {
    %c0_i32 = arith.constant 0 : i32
    %c0_i32_0 = arith.constant 0 : i32
    return %c0_i32, %arg0 : i32, i32
  }
  func.func @transform_3(%arg0: i32, %arg1: i32) -> (i32, i32, i32) {
    %c0_i32 = arith.constant 0 : i32
    %c0_i32_0 = arith.constant 0 : i32
    return %arg1, %c0_i32, %arg0 : i32, i32, i32
  }
}

</mosaic_0001>

<llo_original>
// kernel: tpu_custom_call.1
$region0: #{tpu_custom_call.1}
  #allocation0 [shape = 'u32[]', space=smem, size = 0x4, offset = 0x4, fixed_abs, tag = 'smem constant byte address 0x4 - core index']
  #allocation1 [shape = 'u32[144,128]{1,0:T(1,128)}', space=vmem, size = 0x12000, scoped, tag = 'internal scratch']
  %s0 = inlined_call_operand.hbm [shape: f32[2,8,32], index: 0, kind: input, shape index: {}]
  %s1 = inlined_call_operand.hbm [shape: f32[4,32], index: 1, kind: input, shape index: {}]
  %s2 = inlined_call_operand.vmem [shape: f32[1,32], index: 2, kind: input, shape index: {}]
  %s3 = inlined_call_operand.hbm [shape: f32[2,8,32], index: 3, kind: output, shape index: {}]
  %s4 = sld [smem:[#allocation0]]
  $region53: #{tpu_custom_call.1} parent=0
    _
  %s6 = ssub.s32 1, %s4
  %s7 = scalar_select 0, %s6, %s4
  $region1: #{tpu_custom_call.1} parent=0
    #allocation2 [shape = 'u8[8192]{0}', space=vmem, size = 0x2000, scoped, tag = 'input window, operand 0']
    #allocation3 [shape = 's32[2]{0}', space=sflag, size = 0x8, scoped, tag = 'scoped memory for tpu_custom_call.1']
    #allocation4 [shape = 's32[2]{0}', space=sflag, size = 0x8, scoped, tag = 'scoped memory for tpu_custom_call.1']
    #allocation5 [shape = 'u8[2048]{0}', space=vmem, size = 0x800, scoped, tag = 'input window, operand 1, single buffered']
    #allocation6 [shape = 's32[1]{0}', space=sflag, size = 0x4, scoped, tag = 'scoped memory for tpu_custom_call.1']
    #allocation7 [shape = 'u8[8192]{0}', space=vmem, size = 0x2000, scoped, tag = 'output window, operand 0']
    %8 = vsyncpa [#allocation3], 0
    %s9 = scalar_lea.sflag [#allocation3], 1
    %10 = vsyncpa %s9, 0
    %11 = vsyncpa [#allocation6], 0
    %12 = vsyncpa [#allocation4], 0
    %s13 = scalar_lea.sflag [#allocation4], 1
    %14 = vsyncpa %s13, 0
    loop: start=0, step=1, limit=4
    $region2: #{tpu_custom_call.1} parent=1 // loop_pre_header
      _
    $region3: #{tpu_custom_call.1} parent=1 // loop_header
      %s16 = sphi 0, %s20
      %p17 = scmp.ge.s32.totalorder %s16, 4
      %s23 = sphi 0, %s35
      %s24 = sphi 0, %s31
      %s25 = sphi 0, %s23
      %s26 = sphi 0, %s24
      %s27 = sphi 0, %s25
      %s28 = sphi 0, %s26
      %s40 = sphi 0, %s42
      %s43 = sphi 0, %s40
      %s44 = sphi 0, %s43
      %s60 = sphi 0, %s44
      %s66 = sphi 0, %s68
      %s69 = sphi 0, %s66
      %s70 = sphi 0, %s69
      %s86 = sphi 0, %s70
      %s92 = sphi 0, %s94
      %s95 = sphi 0, %s92
      %s96 = sphi 0, %s95
      %s112 = sphi 0, %s96
      %s120 = sphi 0, %s122
      %s123 = sphi 0, %s120
      %s124 = sphi 0, %s123
      %s140 = sphi 0, %s124
    $region4: #{tpu_custom_call.1} parent=1 // loop_header_branch
      %19 = sbr.rel (%p17) target = $region8
    $region5: #{tpu_custom_call.1} parent=1 // loop_body
      %s21 = ssub.s32 %s16, 1
      %s22 = ssub.s32 %s16, 2
      %s29 = sadd.s32 1, %s24
      %p30 = scmp.ge.s32.totalorder %s29, 2
      %s31 = scalar_select %p30, 0, %s29
      %s32 = sadd.s32 1, %s23
      %s33 = scalar_select %p30, %s32, %s23
      %p34 = scmp.ge.s32.totalorder %s33, 1
      %s35 = scalar_select %p34, 0, %s33
      %s36 = ssub.s32 %s24, %s31
      %s37 = ssub.s32 %s23, %s35
      %s38 = sor.u32 %s36, %s37
      %p39 = scmp.eq.s32.totalorder %s38, 0
      %s41 = sadd.s32 %s40, 1
      %s42 = scalar_select %p39, %s40, %s41
      %p45 = pneg %p39
      %p46 = scmp.eq.s32.totalorder %s16, 1
      %p47 = por %p45, %p46
      %p48 = scmp.ne.s32.totalorder %s40, %s43
      %p49 = scmp.eq.s32.totalorder %s16, 0
      %p50 = por %p48, %p49
      %p51 = scmp.ne.s32.totalorder %s40, %s43
      %p52 = scmp.eq.s32.totalorder %s21, 1
      %p53 = por %p51, %p52
      %p54 = scmp.ne.s32.totalorder %s43, %s44
      %p55 = scmp.eq.s32.totalorder %s21, 0
      %p56 = por %p54, %p55
      %p57 = scmp.ne.s32.totalorder %s43, %s44
      %p58 = scmp.eq.s32.totalorder %s22, 1
      %p59 = por %p57, %p58
      %p61 = scmp.ne.s32.totalorder %s44, %s60
      %p62 = scmp.eq.s32.totalorder %s22, 0
      %p63 = por %p61, %p62
      %s64 = ssub.s32 %s23, %s35
      %p65 = scmp.eq.s32.totalorder %s64, 0
      %s67 = sadd.s32 %s66, 1
      %s68 = scalar_select %p65, %s66, %s67
      %p71 = pneg %p65
      %p72 = scmp.eq.s32.totalorder %s16, 1
      %p73 = por %p71, %p72
      %p74 = scmp.ne.s32.totalorder %s66, %s69
      %p75 = scmp.eq.s32.totalorder %s16, 0
      %p76 = por %p74, %p75
      %p77 = scmp.ne.s32.totalorder %s66, %s69
      %p78 = scmp.eq.s32.totalorder %s21, 1
      %p79 = por %p77, %p78
      %p80 = scmp.ne.s32.totalorder %s69, %s70
      %p81 = scmp.eq.s32.totalorder %s21, 0
      %p82 = por %p80, %p81
      %p83 = scmp.ne.s32.totalorder %s69, %s70
      %p84 = scmp.eq.s32.totalorder %s22, 1
      %p85 = por %p83, %p84
      %p87 = scmp.ne.s32.totalorder %s70, %s86
      %p88 = scmp.eq.s32.totalorder %s22, 0
      %p89 = por %p87, %p88
      %s90 = ssub.s32 %s23, %s35
      %p91 = scmp.eq.s32.totalorder %s90, 0
      %s93 = sadd.s32 %s92, 1
      %s94 = scalar_select %p91, %s92, %s93
      %p97 = pneg %p91
      %p98 = scmp.eq.s32.totalorder %s16, 1
      %p99 = por %p97, %p98
      %p100 = scmp.ne.s32.totalorder %s92, %s95
      %p101 = scmp.eq.s32.totalorder %s16, 0
      %p102 = por %p100, %p101
      %p103 = scmp.ne.s32.totalorder %s92, %s95
      %p104 = scmp.eq.s32.totalorder %s21, 1
      %p105 = por %p103, %p104
      %p106 = scmp.ne.s32.totalorder %s95, %s96
      %p107 = scmp.eq.s32.totalorder %s21, 0
      %p108 = por %p106, %p107
      %p109 = scmp.ne.s32.totalorder %s95, %s96
      %p110 = scmp.eq.s32.totalorder %s22, 1
      %p111 = por %p109, %p110
      %p113 = scmp.ne.s32.totalorder %s96, %s112
      %p114 = scmp.eq.s32.totalorder %s22, 0
      %p115 = por %p113, %p114
      %s116 = ssub.s32 %s24, %s31
      %s117 = ssub.s32 %s23, %s35
      %s118 = sor.u32 %s116, %s117
      %p119 = scmp.eq.s32.totalorder %s118, 0
      %s121 = sadd.s32 %s120, 1
      %s122 = scalar_select %p119, %s120, %s121
      %p125 = pneg %p119
      %p126 = scmp.eq.s32.totalorder %s16, 1
      %p127 = por %p125, %p126
      %p128 = scmp.ne.s32.totalorder %s120, %s123
      %p129 = scmp.eq.s32.totalorder %s16, 0
      %p130 = por %p128, %p129
      %p131 = scmp.ne.s32.totalorder %s120, %s123
      %p132 = scmp.eq.s32.totalorder %s21, 1
      %p133 = por %p131, %p132
      %p134 = scmp.ne.s32.totalorder %s123, %s124
      %p135 = scmp.eq.s32.totalorder %s21, 0
      %p136 = por %p134, %p135
      %p137 = scmp.ne.s32.totalorder %s123, %s124
      %p138 = scmp.eq.s32.totalorder %s22, 1
      %p139 = por %p137, %p138
      %p141 = scmp.ne.s32.totalorder %s124, %s140
      %p142 = scmp.eq.s32.totalorder %s22, 0
      %p143 = por %p141, %p142
      %p144 = scmp.le.s32.totalorder 1, %s16
      %p145 = scmp.lt.s32.totalorder %s16, 3
      %p146 = pnand %p144, %p145
      %p147 = pneg %p146
      // Predicated region
      $region9: #{tpu_custom_call.1} parent=5 // pred_check
        _
      $region10: #{tpu_custom_call.1} parent=5 // pred_check_branch
        %149 = sbr.rel (%p146) target = $region12
      $region11: #{tpu_custom_call.1} parent=5 // pred_region
        %s150 = ssub.s32 %s16, 1
        // Predicated region
        $region13: #{tpu_custom_call.1} parent=11 // pred_check
          %p151 = pneg %p82
        $region14: #{tpu_custom_call.1} parent=11 // pred_check_branch
          %153 = sbr.rel (%p151) target = $region16
        $region15: #{tpu_custom_call.1} parent=11 // pred_region
          %s155 = ssub.s32 64, 64
          %156 = vsyncadd [#allocation6], %s155
          %s157 = smul.addr %s25, 64
          %s158 = scalar_lea.hbm %s1, %s157
          %s160 = sshll.u32 [#allocation5], 4
          %s161 = int_to_ptr.vmem [resolvable:$true] %s160
          %163 = dma.hbm_to_vmem [thread:$0]  %s158, 64, %s161, [#allocation6]
        $region16: #{tpu_custom_call.1} parent=11 // pred_fallthru
          _
        // Predicated region
        $region17: #{tpu_custom_call.1} parent=11 // pred_check
          %p164 = pneg %p108
        $region18: #{tpu_custom_call.1} parent=11 // pred_check_branch
          %166 = sbr.rel (%p164) target = $region20
        $region19: #{tpu_custom_call.1} parent=11 // pred_region
          %p167 = scmp.lt.s32.totalorder %s25, 0
          %s168 = scalar_select %p167, %s25, 0
          %s169 = scalar_lea.vmem %s2, %s168
        $region20: #{tpu_custom_call.1} parent=11 // pred_fallthru
          _
      $region12: #{tpu_custom_call.1} parent=5 // pred_fallthru
        _
      %p170 = scmp.lt.s32.totalorder %s16, 2
      // Predicated region
      $region21: #{tpu_custom_call.1} parent=5 // pred_check
        %p171 = pneg %p170
      $region22: #{tpu_custom_call.1} parent=5 // pred_check_branch
        %173 = sbr.rel (%p171) target = $region24
      $region23: #{tpu_custom_call.1} parent=5 // pred_region
        // Predicated region
        $region25: #{tpu_custom_call.1} parent=23 // pred_check
          %p174 = pneg %p50
        $region26: #{tpu_custom_call.1} parent=23 // pred_check_branch
          %176 = sbr.rel (%p174) target = $region28
        $region27: #{tpu_custom_call.1} parent=23 // pred_region
          %s177 = sand.u32 %s40, 1
          %s178 = scalar_lea.sflag [#allocation3], %s177
          %s179 = sand.u32 %s40, 1
          %s180 = smul.addr %s179, 8
          %s181 = scalar_lea.vmem [#allocation2], %s180
          %s183 = ssub.s32 128, 128
          %184 = vsyncadd %s178, %s183
          %s185 = sadd.s32 %s23, %s24
          %s186 = smul.addr %s185, 128
          %s187 = scalar_lea.hbm %s0, %s186
          %s189 = sshll.u32 %s181, 4
          %s190 = int_to_ptr.vmem [resolvable:$true] %s189
          %192 = dma.hbm_to_vmem [thread:$0]  %s187, 128, %s190, %s178
        $region28: #{tpu_custom_call.1} parent=23 // pred_fallthru
          _
      $region24: #{tpu_custom_call.1} parent=5 // pred_fallthru
        _
      %p193 = scmp.le.s32.totalorder 1, %s16
      %p194 = scmp.lt.s32.totalorder %s16, 3
      %p195 = pnand %p193, %p194
      %p196 = pneg %p195
      // Predicated region
      $region29: #{tpu_custom_call.1} parent=5 // pred_check
        _
      $region30: #{tpu_custom_call.1} parent=5 // pred_check_branch
        %198 = sbr.rel (%p195) target = $region32
      $region31: #{tpu_custom_call.1} parent=5 // pred_region
        %s199 = ssub.s32 %s16, 1
        %s200 = sand.u32 %s43, 1
        %s201 = scalar_lea.sflag [#allocation3], %s200
        %s202 = sand.u32 %s43, 1
        %s203 = smul.addr %s202, 8
        %s204 = scalar_lea.vmem [#allocation2], %s203
        // Predicated region
        $region33: #{tpu_custom_call.1} parent=31 // pred_check
          %p205 = pneg %p56
        $region34: #{tpu_custom_call.1} parent=31 // pred_check_branch
          %207 = sbr.rel (%p205) target = $region36
        $region35: #{tpu_custom_call.1} parent=31 // pred_region
          %208 = dma.done %s201, 128
        $region36: #{tpu_custom_call.1} parent=31 // pred_fallthru
          _
        // Predicated region
        $region37: #{tpu_custom_call.1} parent=31 // pred_check
          %p209 = pneg %p82
        $region38: #{tpu_custom_call.1} parent=31 // pred_check_branch
          %211 = sbr.rel (%p209) target = $region40
        $region39: #{tpu_custom_call.1} parent=31 // pred_region
          %212 = dma.done [#allocation6], 64
        $region40: #{tpu_custom_call.1} parent=31 // pred_fallthru
          _
        %s213 = sand.u32 %s43, 1
        %s214 = scalar_lea.sflag [#allocation3], %s213
        %s215 = sand.u32 %s43, 1
        %s216 = smul.addr %s215, 8
        %s217 = scalar_lea.vmem [#allocation2], %s216
        %p218 = pneg %p56
        %p219 = pneg %p53
        %p220 = pneg %p82
        %p221 = pneg %p79
        %p222 = scmp.lt.s32.totalorder %s25, 0
        %s223 = scalar_select %p222, %s25, 0
        %s224 = scalar_lea.vmem %s2, %s223
        %p225 = pneg %p108
        %p226 = pneg %p105
        %p227 = pneg %p136
        %p228 = pneg %p133
        %s229 = sand.u32 %s123, 1
        %s230 = scalar_lea.sflag [#allocation4], %s229
        %s231 = sand.u32 %s123, 1
        %s232 = smul.addr %s231, 8
        %s233 = scalar_lea.vmem [#allocation7], %s232
        %p234 = scmp.lt.s32.totalorder %s25, 0
        %s235 = scalar_select %p234, %s25, 0
        %s236 = scalar_lea.vmem %s2, %s235
        %v237 = vld [vmem:[%s204] sm:$0xff]
        %v238 = vld [vmem:[#allocation5] sm:$0xf]
        %v239 = vld [vmem:[%s236] sm:$0x1]
        %v240 = vlaneseq
        %v241 = vshrl.u32 %v240, 7
        %v243 = vlaneseq
        %v244 = vshrl.u32 %v243, 7
        %v245 = vsub.s32 0, %v244
        %v246 = vrot.slane %v239, %v245
        %v248 = vadd.f32 %v237, %v246
        %v249 = vrot.slane %v237, 7
        %v250 = vadd.s32 %v241, 4294967295
        %vm251 = vcmp.ge.s32.totalorder %v250, 0
        %vm252 = vcmp.lt.s32.totalorder %v250, 8
        %vm253 = vmand %vm251, %vm252
        %v254 = vsel %vm253, %v249, 0.0
        %v255 = vlaneseq
        %v256 = vshrl.u32 %v255, 7
        %v257 = vsub.s32 0, %v256
        %v258 = vrot.slane %v238, %v257
        %v259 = vmul.f32 %v258, %v254
        %v260 = vadd.f32 %v248, %v259
        %v261 = vlaneseq
        %v262 = vshrl.u32 %v261, 7
        %v263 = vsub.s32 1, %v262
        %v264 = vrot.slane %v238, %v263
        %v265 = vmul.f32 %v264, %v237
        %v266 = vadd.f32 %v260, %v265
        %v267 = vrot.slane %v237, 1
        %v268 = vadd.s32 %v241, 1
        %vm269 = vcmp.ge.s32.totalorder %v268, 0
        %vm270 = vcmp.lt.s32.totalorder %v268, 8
        %vm271 = vmand %vm269, %vm270
        %v272 = vsel %vm271, %v267, 0.0
        %v273 = vlaneseq
        %v274 = vshrl.u32 %v273, 7
        %v275 = vsub.s32 2, %v274
        %v276 = vrot.slane %v238, %v275
        %v277 = vmul.f32 %v276, %v272
        %v278 = vadd.f32 %v266, %v277
        %v279 = vrot.slane %v237, 2
        %v280 = vadd.s32 %v241, 2
        %vm281 = vcmp.ge.s32.totalorder %v280, 0
        %vm282 = vcmp.lt.s32.totalorder %v280, 8
        %vm283 = vmand %vm281, %vm282
        %v284 = vsel %vm283, %v279, 0.0
        %v285 = vlaneseq
        %v286 = vshrl.u32 %v285, 7
        %v287 = vsub.s32 3, %v286
        %v288 = vrot.slane %v238, %v287
        %v289 = vmul.f32 %v288, %v284
        %v290 = vadd.f32 %v278, %v289
        %vm291 = vcmask 261120
        %292 = vst.msk [vmem:[%s233] sm:$0xff] %vm291, %v290
        %s293 = sand.u32 %s123, 1
        %s294 = scalar_lea.sflag [#allocation4], %s293
        %s295 = sand.u32 %s123, 1
        %s296 = smul.addr %s295, 8
        %s297 = scalar_lea.vmem [#allocation7], %s296
        // Predicated region
        $region41: #{tpu_custom_call.1} parent=31 // pred_check
          %p298 = pneg %p133
        $region42: #{tpu_custom_call.1} parent=31 // pred_check_branch
          %300 = sbr.rel (%p298) target = $region44
        $region43: #{tpu_custom_call.1} parent=31 // pred_region
          %s302 = ssub.s32 128, 128
          %303 = vsyncadd %s294, %s302
          %s304 = sadd.s32 %s25, %s26
          %s305 = smul.addr %s304, 128
          %s306 = scalar_lea.hbm %s3, %s305
          %s308 = sshll.u32 %s297, 4
          %s309 = int_to_ptr.vmem [resolvable:$true] %s308
          %311 = dma.vmem_to_hbm [thread:$0]  %s309, 128, %s306, %s294
        $region44: #{tpu_custom_call.1} parent=31 // pred_fallthru
          _
      $region32: #{tpu_custom_call.1} parent=5 // pred_fallthru
        _
      %p312 = scmp.le.s32.totalorder 2, %s16
      // Predicated region
      $region45: #{tpu_custom_call.1} parent=5 // pred_check
        %p313 = pneg %p312
      $region46: #{tpu_custom_call.1} parent=5 // pred_check_branch
        %315 = sbr.rel (%p313) target = $region48
      $region47: #{tpu_custom_call.1} parent=5 // pred_region
        %s316 = ssub.s32 %s16, 2
        // Predicated region
        $region49: #{tpu_custom_call.1} parent=47 // pred_check
          %p317 = pneg %p139
        $region50: #{tpu_custom_call.1} parent=47 // pred_check_branch
          %319 = sbr.rel (%p317) target = $region52
        $region51: #{tpu_custom_call.1} parent=47 // pred_region
          %s320 = sand.u32 %s124, 1
          %s321 = scalar_lea.sflag [#allocation4], %s320
          %s322 = sand.u32 %s124, 1
          %s323 = smul.addr %s322, 8
          %s324 = scalar_lea.vmem [#allocation7], %s323
          %325 = dma.done %s321, 128
        $region52: #{tpu_custom_call.1} parent=47 // pred_fallthru
          _
      $region48: #{tpu_custom_call.1} parent=5 // pred_fallthru
        _
    $region6: #{tpu_custom_call.1} parent=1 // loop_footer
      %s20 = sadd.s32 1, %s16
    $region7: #{tpu_custom_call.1} parent=1 // loop_footer_branch
      %15 = sbr.rel target = $region3
    $region8: #{tpu_custom_call.1} parent=1 // loop_exit
      _
    %326 = vsyncpa [#allocation3], 1
    %s327 = scalar_lea.sflag [#allocation3], 1
    %328 = vsyncpa %s327, 1
    %329 = vsyncpa [#allocation6], 1
    %330 = vsyncpa [#allocation4], 1
    %s331 = scalar_lea.sflag [#allocation4], 1
    %332 = vsyncpa %s331, 1

</llo_original>
